<compile_context>
chip_gen: v7x
topology: tpu7x:2x2x1
jax: 0.10.0
libtpu: 0.0.40
codegen_flags: <defaults>
</compile_context>

<pallas_src>
import jax
import jax.numpy as jnp
from jax.experimental import pallas as pl
from jax.experimental.pallas import tpu as pltpu

H1, H2 = 10, 8
DEFAULT_TILE_B = 512  # 512 x 32 f32 = 64 KiB per input buffer; fits every generation's VMEM.


def _round_up(n, m):
    return ((n + m - 1) // m) * m


def l2net_kernel(x_ref, w1_ref, b1_ref, w2_ref, b2_ref, w3_ref, b3_ref, o_ref):
    # Two fused (matmul -> bias -> ReLU) stages on the MXU/VPU, f32 accumulation.
    x = x_ref[...]
    h1 = jnp.dot(x, w1_ref[...], preferred_element_type=jnp.float32) + b1_ref[...]
    h1 = jnp.maximum(h1, 0.0)
    h2 = jnp.dot(h1, w2_ref[...], preferred_element_type=jnp.float32) + b2_ref[...]
    h2 = jnp.maximum(h2, 0.0)
    # Final (8 -> 1) layer: VPU multiply + reduction (w3_ref is (1, 8)); avoids paying
    # a full MXU push/pop for a single output column.
    o_ref[...] = jnp.sum(h2 * w3_ref[...], axis=-1, keepdims=True) + b3_ref[...]


def l2net_forward(x, params, tile_b=DEFAULT_TILE_B):
    """x: (B, F) float32. params: dict with w1 (F,10), b1 (1,10), w2 (10,8), b2 (1,8),
    w3 (1,8), b3 (1,1). Returns (B, 1) float32."""
    B, F = x.shape
    w1, b1, w2, b2, w3, b3 = (
        params["w1"], params["b1"], params["w2"], params["b2"], params["w3"], params["b3"]
    )

    # Batch tile: multiple of 8 (sublane granule), never larger than the padded batch.
    tb = _round_up(min(tile_b, _round_up(B, 8)), 8)
    padded_b = _round_up(B, tb)
    if padded_b != B:
        x = jnp.pad(x, ((0, padded_b - B), (0, 0)))
    num_tiles = padded_b // tb

    const2 = lambda i: (0, 0)  # weights/biases: constant block -> fetched once, VMEM-resident
    weight_bytes = sum(int(a.size) * a.dtype.itemsize for a in (w1, b1, w2, b2, w3, b3))
    cost = pl.CostEstimate(
        flops=2 * padded_b * (F * H1 + H1 * H2 + H2),
        bytes_accessed=padded_b * F * x.dtype.itemsize + padded_b * 4 + weight_bytes,
        transcendentals=0,
    )

    out = pl.pallas_call(
        l2net_kernel,
        out_shape=jax.ShapeDtypeStruct((padded_b, 1), jnp.float32),
        grid=(num_tiles,),
        in_specs=[
            pl.BlockSpec((tb, F), lambda i: (i, 0)),   # x: streamed + double-buffered
            pl.BlockSpec(w1.shape, const2),
            pl.BlockSpec(b1.shape, const2),
            pl.BlockSpec(w2.shape, const2),
            pl.BlockSpec(b2.shape, const2),
            pl.BlockSpec(w3.shape, const2),
            pl.BlockSpec(b3.shape, const2),
        ],
        out_specs=pl.BlockSpec((tb, 1), lambda i: (i, 0)),
        compiler_params=pltpu.CompilerParams(dimension_semantics=("parallel",)),
        cost_estimate=cost,
    )(x, w1, b1, w2, b2, w3, b3)
    # TODO(synk): optional lane-dense (1, TILE_B) output layout would avoid masked
    # width-1 stores, at the cost of an in-kernel sublane->lane transpose; skipped
    # since output bytes are negligible here.
    return out[:B]


def init_params(key, input_size):
    """Deterministic init mirroring nn.Linear default (uniform +/- 1/sqrt(fan_in)).
    w1/w2 stored transposed as (in, out); w3 stored as (1, 8) for the VPU reduce."""
    def linear(key, fan_in, fan_out, transpose):
        kw, kb = jax.random.split(key)
        bound = 1.0 / jnp.sqrt(float(fan_in))
        shape = (fan_in, fan_out) if transpose else (fan_out, fan_in)
        w = jax.random.uniform(kw, shape, jnp.float32, -bound, bound)
        b = jax.random.uniform(kb, (1, fan_out), jnp.float32, -bound, bound)
        return w, b

    k1, k2, k3 = jax.random.split(key, 3)
    w1, b1 = linear(k1, input_size, H1, transpose=True)
    w2, b2 = linear(k2, H1, H2, transpose=True)
    w3, b3 = linear(k3, H2, 1, transpose=False)   # (1, 8) and (1, 1)
    return {"w1": w1, "b1": b1, "w2": w2, "b2": b2, "w3": w3, "b3": b3}


def l2net_reference(x, params):
    h1 = jnp.maximum(x @ params["w1"] + params["b1"], 0.0)
    h2 = jnp.maximum(h1 @ params["w2"] + params["b2"], 0.0)
    return jnp.sum(h2 * params["w3"], axis=-1, keepdims=True) + params["b3"]


if __name__ == "__main__":
    key = jax.random.PRNGKey(0)
    k_param, k_x, k_x2 = jax.random.split(key, 3)

    batch, input_size = 8, 32
    params = init_params(k_param, input_size)

    # Small case (single tile, no padding).
    x = jax.random.normal(k_x, (batch, input_size), dtype=jnp.float32)
    out = jax.block_until_ready(l2net_forward(x, params))
    ref = l2net_reference(x, params)
    assert out.shape == (batch, 1)
    assert jnp.allclose(out, ref, atol=1e-5, rtol=1e-5)

    # Multi-tile case with a ragged tail (exercises batch grid + padding path).
    x2 = jax.random.normal(k_x2, (300, input_size), dtype=jnp.float32)
    out2 = jax.block_until_ready(l2net_forward(x2, params, tile_b=128))
    ref2 = l2net_reference(x2, params)
    assert out2.shape == (300, 1)
    assert jnp.allclose(out2, ref2, atol=1e-5, rtol=1e-5)

    print("KERNEL_OK")
</pallas_src>

<mosaic_0001>
module attributes {stable_mosaic.version = 11 : i64} {
  func.func @l2net_kernel(%arg0: i32, %arg1: memref<8x32xf32, #tpu.memory_space<vmem>>, %arg2: memref<32x10xf32, #tpu.memory_space<vmem>>, %arg3: memref<1x10xf32, #tpu.memory_space<vmem>>, %arg4: memref<10x8xf32, #tpu.memory_space<vmem>>, %arg5: memref<1x8xf32, #tpu.memory_space<vmem>>, %arg6: memref<1x8xf32, #tpu.memory_space<vmem>>, %arg7: memref<1x1xf32, #tpu.memory_space<vmem>>, %arg8: memref<8x1xf32, #tpu.memory_space<vmem>>) attributes {dimension_semantics = [#tpu.dimension_semantics<parallel>], iteration_bounds = array<i64: 1>, scalar_prefetch = 0 : i64, scratch_operands = 0 : i64, tpu.core_type = #tpu.core_type<tc>, window_params = [{transform_indices = @transform_0, window_bounds = array<i64: 8, 32>}, {pipeline_mode = #tpu.pipeline_mode<synchronous>, transform_indices = @transform_1, window_bounds = array<i64: 32, 10>}, {pipeline_mode = #tpu.pipeline_mode<synchronous>, transform_indices = @transform_2, window_bounds = array<i64: 1, 10>}, {pipeline_mode = #tpu.pipeline_mode<synchronous>, transform_indices = @transform_3, window_bounds = array<i64: 10, 8>}, {pipeline_mode = #tpu.pipeline_mode<synchronous>, transform_indices = @transform_4, window_bounds = array<i64: 1, 8>}, {pipeline_mode = #tpu.pipeline_mode<synchronous>, transform_indices = @transform_5, window_bounds = array<i64: 1, 8>}, {pipeline_mode = #tpu.pipeline_mode<synchronous>, transform_indices = @transform_6, window_bounds = array<i64: 1, 1>}, {transform_indices = @transform_7, window_bounds = array<i64: 8, 1>}]} {
    %c0 = arith.constant 0 : index
    %c0_0 = arith.constant 0 : index
    %0 = vector.load %arg1[%c0, %c0_0] : memref<8x32xf32, #tpu.memory_space<vmem>>, vector<8x32xf32>
    %c0_1 = arith.constant 0 : index
    %c0_2 = arith.constant 0 : index
    %1 = vector.load %arg2[%c0_1, %c0_2] : memref<32x10xf32, #tpu.memory_space<vmem>>, vector<32x10xf32>
    %cst = arith.constant dense<0.000000e+00> : vector<8x10xf32>
    %2 = tpu.matmul %0, %1, %cst {dimension_numbers = #tpu.dot_dimension_numbers<[1], [0], [0], [1], [0, 0, 1, 1], [], []>} : vector<8x32xf32>, vector<32x10xf32>, vector<8x10xf32> -> vector<8x10xf32>
    %c0_3 = arith.constant 0 : index
    %c0_4 = arith.constant 0 : index
    %3 = vector.load %arg3[%c0_3, %c0_4] : memref<1x10xf32, #tpu.memory_space<vmem>>, vector<1x10xf32>
    %4 = vector.broadcast %3 : vector<1x10xf32> to vector<8x10xf32>
    %5 = arith.addf %2, %4 : vector<8x10xf32>
    %cst_5 = arith.constant 0.000000e+00 : f32
    %6 = vector.broadcast %cst_5 : f32 to vector<8x10xf32>
    %7 = arith.maximumf %5, %6 : vector<8x10xf32>
    %c0_6 = arith.constant 0 : index
    %c0_7 = arith.constant 0 : index
    %8 = vector.load %arg4[%c0_6, %c0_7] : memref<10x8xf32, #tpu.memory_space<vmem>>, vector<10x8xf32>
    %cst_8 = arith.constant dense<0.000000e+00> : vector<8x8xf32>
    %9 = tpu.matmul %7, %8, %cst_8 {dimension_numbers = #tpu.dot_dimension_numbers<[1], [0], [0], [1], [0, 0, 1, 1], [], []>} : vector<8x10xf32>, vector<10x8xf32>, vector<8x8xf32> -> vector<8x8xf32>
    %c0_9 = arith.constant 0 : index
    %c0_10 = arith.constant 0 : index
    %10 = vector.load %arg5[%c0_9, %c0_10] : memref<1x8xf32, #tpu.memory_space<vmem>>, vector<1x8xf32>
    %11 = vector.broadcast %10 : vector<1x8xf32> to vector<8x8xf32>
    %12 = arith.addf %9, %11 : vector<8x8xf32>
    %cst_11 = arith.constant 0.000000e+00 : f32
    %13 = vector.broadcast %cst_11 : f32 to vector<8x8xf32>
    %14 = arith.maximumf %12, %13 : vector<8x8xf32>
    %c0_12 = arith.constant 0 : index
    %c0_13 = arith.constant 0 : index
    %15 = vector.load %arg6[%c0_12, %c0_13] : memref<1x8xf32, #tpu.memory_space<vmem>>, vector<1x8xf32>
    %16 = vector.broadcast %15 : vector<1x8xf32> to vector<8x8xf32>
    %17 = arith.mulf %14, %16 : vector<8x8xf32>
    %cst_14 = arith.constant dense<0.000000e+00> : vector<8xf32>
    %18 = vector.multi_reduction <add>, %17, %cst_14 [1] : vector<8x8xf32> to vector<8xf32>
    %19 = vector.shape_cast %18 : vector<8xf32> to vector<8x1xf32>
    %c0_15 = arith.constant 0 : index
    %c0_16 = arith.constant 0 : index
    %20 = vector.load %arg7[%c0_15, %c0_16] : memref<1x1xf32, #tpu.memory_space<vmem>>, vector<1x1xf32>
    %21 = vector.broadcast %20 : vector<1x1xf32> to vector<8x1xf32>
    %22 = arith.addf %19, %21 : vector<8x1xf32>
    %c0_17 = arith.constant 0 : index
    %c0_18 = arith.constant 0 : index
    %23 = vector.load %arg8[%c0_17, %c0_18] : memref<8x1xf32, #tpu.memory_space<vmem>>, vector<8x1xf32>
    tpu.vector_store %arg8[%c0_17, %c0_18], %22 {strides = array<i32>} : memref<8x1xf32, #tpu.memory_space<vmem>>, vector<8x1xf32>,
    return
  }
  func.func @transform_0(%arg0: i32) -> (i32, i32) {
    %c0_i32 = arith.constant 0 : i32
    %c0_i32_0 = arith.constant 0 : i32
    return %arg0, %c0_i32 : i32, i32
  }
  func.func @transform_1(%arg0: i32) -> (i32, i32) {
    %c0_i32 = arith.constant 0 : i32
    %c0_i32_0 = arith.constant 0 : i32
    %c0_i32_1 = arith.constant 0 : i32
    return %c0_i32, %c0_i32_0 : i32, i32
  }
  func.func @transform_2(%arg0: i32) -> (i32, i32) {
    %c0_i32 = arith.constant 0 : i32
    %c0_i32_0 = arith.constant 0 : i32
    %c0_i32_1 = arith.constant 0 : i32
    return %c0_i32, %c0_i32_0 : i32, i32
  }
  func.func @transform_3(%arg0: i32) -> (i32, i32) {
    %c0_i32 = arith.constant 0 : i32
    %c0_i32_0 = arith.constant 0 : i32
    %c0_i32_1 = arith.constant 0 : i32
    return %c0_i32, %c0_i32_0 : i32, i32
  }
  func.func @transform_4(%arg0: i32) -> (i32, i32) {
    %c0_i32 = arith.constant 0 : i32
    %c0_i32_0 = arith.constant 0 : i32
    %c0_i32_1 = arith.constant 0 : i32
    return %c0_i32, %c0_i32_0 : i32, i32
  }
  func.func @transform_5(%arg0: i32) -> (i32, i32) {
    %c0_i32 = arith.constant 0 : i32
    %c0_i32_0 = arith.constant 0 : i32
    %c0_i32_1 = arith.constant 0 : i32
    return %c0_i32, %c0_i32_0 : i32, i32
  }
  func.func @transform_6(%arg0: i32) -> (i32, i32) {
    %c0_i32 = arith.constant 0 : i32
    %c0_i32_0 = arith.constant 0 : i32
    %c0_i32_1 = arith.constant 0 : i32
    return %c0_i32, %c0_i32_0 : i32, i32
  }
  func.func @transform_7(%arg0: i32) -> (i32, i32) {
    %c0_i32 = arith.constant 0 : i32
    %c0_i32_0 = arith.constant 0 : i32
    return %arg0, %c0_i32 : i32, i32
  }
}

</mosaic_0001>

<llo_original>
// kernel: tpu_custom_call.1
$region0: #{tpu_custom_call.1}
  #allocation0 [shape = 'u32[]', space=smem, size = 0x4, offset = 0x4, fixed_abs, tag = 'smem constant byte address 0x4 - core index']
  #allocation1 [shape = 'u32[144,128]{1,0:T(1,128)}', space=vmem, size = 0x12000, scoped, tag = 'internal scratch']
  #allocation2 [shape = 'f32[1,1]{1,0:T(1,128)S(1)}', space=vmem, size = 0x200, scoped, tag = 'scoped memory for tpu_custom_call.1']
  %s0 = inlined_call_operand.vmem [shape: f32[8,32], index: 0, kind: input, shape index: {}]
  %s1 = inlined_call_operand.vmem [shape: f32[32,10], index: 1, kind: input, shape index: {}]
  %s2 = inlined_call_operand.vmem [shape: f32[1,10], index: 2, kind: input, shape index: {}]
  %s3 = inlined_call_operand.vmem [shape: f32[10,8], index: 3, kind: input, shape index: {}]
  %s4 = inlined_call_operand.vmem [shape: f32[1,8], index: 4, kind: input, shape index: {}]
  %s5 = inlined_call_operand.vmem [shape: f32[1,8], index: 5, kind: input, shape index: {}]
  %s6 = inlined_call_operand.<no memory space> [shape: f32[1,1], index: 6, kind: input, shape index: {}]
  %s7 = inlined_call_operand.vmem [shape: f32[8,1], index: 7, kind: output, shape index: {}]
  %s8 = sld [smem:[#allocation0]]
  $region38: #{tpu_custom_call.1} parent=0
    _
  %s10 = ssub.s32 1, %s8
  %s11 = scalar_select 0, %s10, %s8
  %v12 = vstv %s6
  %13 = vst [vmem:[#allocation2] sm:$0x1] %v12
  // Predicated region
  $region2: #{tpu_custom_call.1} parent=0 // pred_check
    _
  $region3: #{tpu_custom_call.1} parent=0 // pred_check_branch
    %15 = sbr.rel (0) target = $region5
  $region4: #{tpu_custom_call.1} parent=0 // pred_region
    _
  $region5: #{tpu_custom_call.1} parent=0 // pred_fallthru
    _
  // Predicated region
  $region6: #{tpu_custom_call.1} parent=0 // pred_check
    _
  $region7: #{tpu_custom_call.1} parent=0 // pred_check_branch
    %17 = sbr.rel (0) target = $region9
  $region8: #{tpu_custom_call.1} parent=0 // pred_region
    _
  $region9: #{tpu_custom_call.1} parent=0 // pred_fallthru
    _
  // Predicated region
  $region10: #{tpu_custom_call.1} parent=0 // pred_check
    _
  $region11: #{tpu_custom_call.1} parent=0 // pred_check_branch
    %19 = sbr.rel (0) target = $region13
  $region12: #{tpu_custom_call.1} parent=0 // pred_region
    _
  $region13: #{tpu_custom_call.1} parent=0 // pred_fallthru
    _
  // Predicated region
  $region14: #{tpu_custom_call.1} parent=0 // pred_check
    _
  $region15: #{tpu_custom_call.1} parent=0 // pred_check_branch
    %21 = sbr.rel (0) target = $region17
  $region16: #{tpu_custom_call.1} parent=0 // pred_region
    _
  $region17: #{tpu_custom_call.1} parent=0 // pred_fallthru
    _
  // Predicated region
  $region18: #{tpu_custom_call.1} parent=0 // pred_check
    _
  $region19: #{tpu_custom_call.1} parent=0 // pred_check_branch
    %23 = sbr.rel (0) target = $region21
  $region20: #{tpu_custom_call.1} parent=0 // pred_region
    _
  $region21: #{tpu_custom_call.1} parent=0 // pred_fallthru
    _
  // Predicated region
  $region22: #{tpu_custom_call.1} parent=0 // pred_check
    _
  $region23: #{tpu_custom_call.1} parent=0 // pred_check_branch
    %25 = sbr.rel (0) target = $region25
  $region24: #{tpu_custom_call.1} parent=0 // pred_region
    _
  $region25: #{tpu_custom_call.1} parent=0 // pred_fallthru
    _
  // Predicated region
  $region26: #{tpu_custom_call.1} parent=0 // pred_check
    _
  $region27: #{tpu_custom_call.1} parent=0 // pred_check_branch
    %27 = sbr.rel (0) target = $region29
  $region28: #{tpu_custom_call.1} parent=0 // pred_region
    _
  $region29: #{tpu_custom_call.1} parent=0 // pred_fallthru
    _
  %v28 = vld [vmem:[%s0] sm:$0xff]
  %v29 = vld [vmem:[%s1] sm:$0xff]
  %v30 = vld [vmem:[%s1 + $0x8] sm:$0xff]
  %v31 = vld [vmem:[%s1 + $0x10] sm:$0xff]
  %v32 = vld [vmem:[%s1 + $0x18] sm:$0xff]
  %v33 = vld [vmem:[%s2] sm:$0x1]
  %v35 = vlaneseq
  %v36 = vshrl.u32 %v35, 7
  %v37 = vsub.s32 0, %v36
  %v38 = vrot.slane %v33, %v37
  %vm40 = vcmask 261120
  %v42 = vsel %vm40, %v28, 0
  %44 = vmatprep.subr.mxu0 0.0
  %45 = vmatpush1.msra.mxu0 %v29
  %46 = vmatprep.subr.mxu0 0.0
  %47 = vmatpush1.msra.mxu0 %v30
  %48 = vmatprep.subr.mxu0 0.0
  %49 = vmatpush1.msra.mxu0 %v31
  %50 = vmatprep.subr.mxu0 0.0
  %51 = vmatpush1.msra.mxu0 %v32
  %52 = vmatprep.subr.mxu0 0.0
  %53 = vmatpush1.msra.mxu0 0.0
  %54 = vmatprep.subr.mxu0 0.0
  %55 = vmatpush1.msra.mxu0 0.0
  %56 = vmatprep.subr.mxu0 0.0
  %57 = vmatpush1.msra.mxu0 0.0
  %58 = vmatprep.subr.mxu0 0.0
  %59 = vmatpush1.msra.mxu0 0.0
  %60 = vmatprep.subr.mxu0 0.0
  %61 = vmatpush1.msra.mxu0 0.0
  %62 = vmatprep.subr.mxu0 0.0
  %63 = vmatpush1.msra.mxu0 0.0
  %64 = vmatprep.subr.mxu0 0.0
  %65 = vmatpush1.msra.mxu0 0.0
  %66 = vmatprep.subr.mxu0 0.0
  %67 = vmatpush1.msra.mxu0 0.0
  %68 = vmatprep.subr.mxu0 0.0
  %69 = vmatpush1.msra.mxu0 0.0
  %70 = vmatprep.subr.mxu0 0.0
  %71 = vmatpush1.msra.mxu0 0.0
  %72 = vmatprep.subr.mxu0 0.0
  %73 = vmatpush1.msra.mxu0 0.0
  %74 = vmatprep.subr.mxu0 0.0
  %75 = vmatpush1.msra.mxu0 0.0
  %76 = vmatprep.subr.mxu0 0.0
  %77 = vmatpush1.msra.mxu0 0.0
  %78 = vmatprep.subr.mxu0 0.0
  %79 = vmatpush1.msra.mxu0 0.0
  %80 = vmatprep.subr.mxu0 0.0
  %81 = vmatpush1.msra.mxu0 0.0
  %82 = vmatprep.subr.mxu0 0.0
  %83 = vmatpush1.msra.mxu0 0.0
  %84 = vmatprep.subr.mxu0 0.0
  %85 = vmatpush1.msra.mxu0 0.0
  %86 = vmatprep.subr.mxu0 0.0
  %87 = vmatpush1.msra.mxu0 0.0
  %88 = vmatprep.subr.mxu0 0.0
  %89 = vmatpush1.msra.mxu0 0.0
  %90 = vmatprep.subr.mxu0 0.0
  %91 = vmatpush1.msra.mxu0 0.0
  %92 = vmatprep.subr.mxu0 0.0
  %93 = vmatpush1.msra.mxu0 0.0
  %94 = vmatprep.subr.mxu0 0.0
  %95 = vmatpush1.msra.mxu0 0.0
  %96 = vmatprep.subr.mxu0 0.0
  %97 = vmatpush1.msra.mxu0 0.0
  %98 = vmatprep.subr.mxu0 0.0
  %99 = vmatpush1.msra.mxu0 0.0
  %100 = vmatprep.subr.mxu0 0.0
  %101 = vmatpush1.msra.mxu0 0.0
  %102 = vmatprep.subr.mxu0 0.0
  %103 = vmatpush1.msra.mxu0 0.0
  %104 = vmatprep.subr.mxu0 0.0
  %105 = vmatpush1.msra.mxu0 0.0
  %106 = vmatprep.subr.mxu0 0.0
  %107 = vmatpush1.msra.mxu0 0.0
  %108 = vmatprep.mubr.f32.mxu0 0.0
  %109 = vmatmul.mubr.f32.gmra.mrb[0].mxu0 %v42
  %v110 = vpop.f32.mrb[0].mxu0
  %v111 = vadd.f32 %v38, %v110
  %v112 = vpop.f32.mrb[0].mxu0
  %113 = vdwg.mxu0
  %v114 = vmax.f32 %v111, 0.0
  %v115 = vld [vmem:[%s3] sm:$0xff]
  %v116 = vld [vmem:[%s3 + $0x8] sm:$0x3]
  %v117 = vld [vmem:[%s4] sm:$0x1]
  %v119 = vlaneseq
  %v120 = vshrl.u32 %v119, 7
  %v121 = vsub.s32 0, %v120
  %v122 = vrot.slane %v117, %v121
  %vm124 = vcmask 80896
  %v126 = vsel %vm124, %v114, 0
  %vm128 = vcmask 1041408
  %v130 = vsel %vm128, %v116, 0
  %132 = vmatprep.subr.mxu0 0.0
  %133 = vmatpush1.msra.mxu0 %v115
  %134 = vmatprep.subr.mxu0 0.0
  %135 = vmatpush1.msra.mxu0 %v130
  %136 = vmatprep.subr.mxu0 0.0
  %137 = vmatpush1.msra.mxu0 0.0
  %138 = vmatprep.subr.mxu0 0.0
  %139 = vmatpush1.msra.mxu0 0.0
  %140 = vmatprep.subr.mxu0 0.0
  %141 = vmatpush1.msra.mxu0 0.0
  %142 = vmatprep.subr.mxu0 0.0
  %143 = vmatpush1.msra.mxu0 0.0
  %144 = vmatprep.subr.mxu0 0.0
  %145 = vmatpush1.msra.mxu0 0.0
  %146 = vmatprep.subr.mxu0 0.0
  %147 = vmatpush1.msra.mxu0 0.0
  %148 = vmatprep.subr.mxu0 0.0
  %149 = vmatpush1.msra.mxu0 0.0
  %150 = vmatprep.subr.mxu0 0.0
  %151 = vmatpush1.msra.mxu0 0.0
  %152 = vmatprep.subr.mxu0 0.0
  %153 = vmatpush1.msra.mxu0 0.0
  %154 = vmatprep.subr.mxu0 0.0
  %155 = vmatpush1.msra.mxu0 0.0
  %156 = vmatprep.subr.mxu0 0.0
  %157 = vmatpush1.msra.mxu0 0.0
  %158 = vmatprep.subr.mxu0 0.0
  %159 = vmatpush1.msra.mxu0 0.0
  %160 = vmatprep.subr.mxu0 0.0
  %161 = vmatpush1.msra.mxu0 0.0
  %162 = vmatprep.subr.mxu0 0.0
  %163 = vmatpush1.msra.mxu0 0.0
  %164 = vmatprep.subr.mxu0 0.0
  %165 = vmatpush1.msra.mxu0 0.0
  %166 = vmatprep.subr.mxu0 0.0
  %167 = vmatpush1.msra.mxu0 0.0
  %168 = vmatprep.subr.mxu0 0.0
  %169 = vmatpush1.msra.mxu0 0.0
  %170 = vmatprep.subr.mxu0 0.0
  %171 = vmatpush1.msra.mxu0 0.0
  %172 = vmatprep.subr.mxu0 0.0
  %173 = vmatpush1.msra.mxu0 0.0
  %174 = vmatprep.subr.mxu0 0.0
  %175 = vmatpush1.msra.mxu0 0.0
  %176 = vmatprep.subr.mxu0 0.0
  %177 = vmatpush1.msra.mxu0 0.0
  %178 = vmatprep.subr.mxu0 0.0
  %179 = vmatpush1.msra.mxu0 0.0
  %180 = vmatprep.subr.mxu0 0.0
  %181 = vmatpush1.msra.mxu0 0.0
  %182 = vmatprep.subr.mxu0 0.0
  %183 = vmatpush1.msra.mxu0 0.0
  %184 = vmatprep.subr.mxu0 0.0
  %185 = vmatpush1.msra.mxu0 0.0
  %186 = vmatprep.subr.mxu0 0.0
  %187 = vmatpush1.msra.mxu0 0.0
  %188 = vmatprep.subr.mxu0 0.0
  %189 = vmatpush1.msra.mxu0 0.0
  %190 = vmatprep.subr.mxu0 0.0
  %191 = vmatpush1.msra.mxu0 0.0
  %192 = vmatprep.subr.mxu0 0.0
  %193 = vmatpush1.msra.mxu0 0.0
  %194 = vmatprep.subr.mxu0 0.0
  %195 = vmatpush1.msra.mxu0 0.0
  %196 = vmatprep.mubr.f32.mxu0 0.0
  %197 = vmatmul.mubr.f32.gmra.mrb[0].mxu0 %v126
  %v198 = vpop.f32.mrb[0].mxu0
  %v199 = vadd.f32 %v122, %v198
  %v200 = vpop.f32.mrb[0].mxu0
  %201 = vdwg.mxu0
  %v202 = vmax.f32 %v199, 0.0
  %v203 = vld [vmem:[%s5] sm:$0x1]
  %v205 = vlaneseq
  %v206 = vshrl.u32 %v205, 7
  %v207 = vsub.s32 0, %v206
  %v208 = vrot.slane %v203, %v207
  %v210 = vmul.f32 %v202, %v208
  %vm211 = vcmask 64512
  %v212 = vsel %vm211, %v210, 0.0
  %213 = vadd.xlane.f32.xlu0 %v212
  %v214 = vpop.xlane.xlu0 %213
  %v215 = vld [vmem:[#allocation2] sm:$0x1]
  %v217 = vlaneseq
  %v218 = vshrl.u32 %v217, 7
  %v219 = vsub.s32 0, %v218
  %v220 = vrot.slane %v215, %v219
  %v222 = vadd.f32 %v214, %v220
  %vm223 = vcmask 7168
  %224 = vst.msk [vmem:[%s7] sm:$0xff] %vm223, %v222
  // Predicated region
  $region30: #{tpu_custom_call.1} parent=0 // pred_check
    _
  $region31: #{tpu_custom_call.1} parent=0 // pred_check_branch
    %226 = sbr.rel (0) target = $region33
  $region32: #{tpu_custom_call.1} parent=0 // pred_region
    _
  $region33: #{tpu_custom_call.1} parent=0 // pred_fallthru
    _
  // Predicated region
  $region34: #{tpu_custom_call.1} parent=0 // pred_check
    _
  $region35: #{tpu_custom_call.1} parent=0 // pred_check_branch
    %228 = sbr.rel (0) target = $region37
  $region36: #{tpu_custom_call.1} parent=0 // pred_region
    _
  $region37: #{tpu_custom_call.1} parent=0 // pred_fallthru
    _

</llo_original>
